<compile_context>
chip_gen: v7x
topology: tpu7x:2x2x1
jax: 0.10.0
libtpu: 0.0.40
codegen_flags: <defaults>
</compile_context>

<pallas_src>
import jax
import jax.numpy as jnp
from jax.experimental import pallas as pl
from jax.experimental.pallas import tpu as pltpu

HIDDEN = 768
PAD_N = 128   # lane-dense padded class axis (num_g + num_i + num_l <= 128)
EPS = 1e-6


# ----------------------------------------------------------------------------
# In-kernel helpers (all f32 -- safe on v5e which has no bf16 VPU/EUP)
# ----------------------------------------------------------------------------
def _feature_stats(h):
    """One-pass batch statistics of a [B, H] f32 feature.

    Returns (mu [1,H], sigma [1,H] = biased var + eps, sum(log sigma) scalar).
    """
    mu = jnp.mean(h, axis=0, keepdims=True)
    var = jnp.mean(h * h, axis=0, keepdims=True) - mu * mu   # biased variance
    sigma = jnp.maximum(var, 0.0) + EPS                      # == clamp(var+eps, min=eps)
    sum_log = jnp.sum(jnp.log(sigma))                        # one log per feature
    return mu, sigma, sum_log


def _kl_from_stats(mu1, sig1, slog1, mu2, slog2, inv_sig2, dim):
    """Gaussian KL(N(mu1,sig1) || N(mu2,sig2)) from precomputed stats.

    inv_sig2 is pl.reciprocal(sigma2, approx=True), reused for both quadratic terms.
    """
    quad = jnp.sum((sig1 + (mu1 - mu2) ** 2) * inv_sig2)
    return 0.5 * (quad + (slog2 - slog1) - dim)


# ----------------------------------------------------------------------------
# Fused forward kernel: 3 classifier heads (1 MXU matmul) + 2 KL scalars
# ----------------------------------------------------------------------------
def _msma_fused_kernel(x_ref, w_ref, b_ref, logits_ref, kl_ref):
    # x rows are stacked [local | mid | global]; one input ref, one DMA.
    x = x_ref[...]                                   # [3B, 768] f32
    three_b, hidden = x.shape
    B = three_b // 3

    # --- classifier heads: one lane-dense [3B, 128] MXU matmul, single weight push ---
    acc = jnp.dot(x.astype(jnp.bfloat16), w_ref[...],
                  preferred_element_type=jnp.float32)
    logits_ref[...] = acc + b_ref[...]               # bias add in f32

    # --- KL statistics: computed exactly once per feature (static slices of x) ---
    hl = x[0 * B:1 * B, :]
    hm = x[1 * B:2 * B, :]
    hg = x[2 * B:3 * B, :]

    mu_l, sig_l, sl_l = _feature_stats(hl)
    mu_m, sig_m, sl_m = _feature_stats(hm)
    mu_g, sig_g, sl_g = _feature_stats(hg)

    # Divides go to the EUP; each reciprocal reused for both terms of its KL.
    inv_m = pl.reciprocal(sig_m, approx=True)
    inv_l = pl.reciprocal(sig_l, approx=True)

    dim = jnp.float32(hidden)
    kl_ref[0] = _kl_from_stats(mu_g, sig_g, sl_g, mu_m, sl_m, inv_m, dim)  # KL(global||mid)
    kl_ref[1] = _kl_from_stats(mu_m, sig_m, sl_m, mu_l, sl_l, inv_l, dim)  # KL(mid||local)


def _make_forward_fn():
    """Jitted forward: ONE pallas_call, no post-kernel XLA ops in the hot path."""

    def fwd(h_stack, w_cat_bf16, b_cat_f32):
        n_rows = h_stack.shape[0]
        logits_pad, kls = pl.pallas_call(
            _msma_fused_kernel,
            out_shape=(
                jax.ShapeDtypeStruct((n_rows, PAD_N), jnp.float32),
                jax.ShapeDtypeStruct((2,), jnp.float32),
            ),
            in_specs=[pl.BlockSpec(memory_space=pltpu.MemorySpace.VMEM)] * 3,
            out_specs=(
                pl.BlockSpec(memory_space=pltpu.MemorySpace.VMEM),
                pl.BlockSpec(memory_space=pltpu.MemorySpace.SMEM),
            ),
        )(h_stack, w_cat_bf16, b_cat_f32)
        return logits_pad, kls

    return jax.jit(fwd)


# ----------------------------------------------------------------------------
# Standalone compute_kl_divergence (module-level dependent function)
# ----------------------------------------------------------------------------
def _kl_kernel(h1_ref, h2_ref, o_ref):
    h1 = h1_ref[...].astype(jnp.float32)
    h2 = h2_ref[...].astype(jnp.float32)
    mu1, sig1, sl1 = _feature_stats(h1)
    mu2, sig2, sl2 = _feature_stats(h2)
    inv2 = pl.reciprocal(sig2, approx=True)
    o_ref[0] = _kl_from_stats(mu1, sig1, sl1, mu2, sl2, inv2, jnp.float32(h1.shape[1]))


@jax.jit
def compute_kl_divergence(h1, h2):
    """Pallas port of the reference compute_kl_divergence; returns an f32 scalar."""
    out = pl.pallas_call(
        _kl_kernel,
        out_shape=jax.ShapeDtypeStruct((1,), jnp.float32),
        in_specs=[pl.BlockSpec(memory_space=pltpu.MemorySpace.VMEM)] * 2,
        out_specs=pl.BlockSpec(memory_space=pltpu.MemorySpace.SMEM),
    )(h1, h2)
    return out[0]


# ----------------------------------------------------------------------------
# MSMA module (forward only)
# ----------------------------------------------------------------------------
class MSMAPallas:
    def __init__(self, config, key):
        self.config = config
        self.num_g = config["num_global_classes"]
        self.num_i = config["num_intermediate_classes"]
        self.num_l = config["num_local_classes"]
        assert self.num_g + self.num_i + self.num_l <= PAD_N
        kg, ki, kl = jax.random.split(key, 3)

        def init_linear(k, out_dim):
            kw, kb = jax.random.split(k)
            bound = 1.0 / jnp.sqrt(HIDDEN)
            w = jax.random.uniform(kw, (HIDDEN, out_dim), jnp.float32, -bound, bound)
            b = jax.random.uniform(kb, (1, out_dim), jnp.float32, -bound, bound)
            return w, b

        # f32 originals kept for reference checks.
        self.w_global, self.b_global = init_linear(kg, self.num_g)
        self.w_inter, self.b_inter = init_linear(ki, self.num_i)
        self.w_local, self.b_local = init_linear(kl, self.num_l)

        # Pre-concatenate + zero-pad to a lane-dense [768, 128] bf16 weight (single
        # MXU push, half DMA bytes) and a [1, 128] f32 bias.  Keep PAD_N = 128.
        n_used = self.num_g + self.num_i + self.num_l
        w_cat = jnp.concatenate([self.w_global, self.w_inter, self.w_local], axis=1)
        b_cat = jnp.concatenate([self.b_global, self.b_inter, self.b_local], axis=1)
        self.w_cat_bf16 = jnp.pad(w_cat, ((0, 0), (0, PAD_N - n_used))).astype(jnp.bfloat16)
        self.b_cat_f32 = jnp.pad(b_cat, ((0, 0), (0, PAD_N - n_used))).astype(jnp.float32)

        self._forward_fn = _make_forward_fn()

    # ---- hot path: no slicing, single kernel dispatch -----------------------
    def forward_stacked(self, h_stack):
        """h_stack: [3B, 768] rows stacked [local | mid | global] (B % 8 == 0 preferred).

        Returns (logits_pad [3B, 128], kl_global_mid, kl_mid_local).  Downstream code
        should slice logits_pad lazily at the point of consumption (see slice_logits).
        """
        logits_pad, kls = self._forward_fn(h_stack, self.w_cat_bf16, self.b_cat_f32)
        return logits_pad, kls[0], kls[1]

    def slice_logits(self, logits_pad):
        """Lazy per-head slices of the padded logits (row blocks x column ranges)."""
        B = logits_pad.shape[0] // 3
        g = logits_pad[2 * B:3 * B, 0:self.num_g]
        i = logits_pad[B:2 * B, self.num_g:self.num_g + self.num_i]
        l = logits_pad[0:B, self.num_g + self.num_i:self.num_g + self.num_i + self.num_l]
        return g, i, l

    # ---- API-compatible paths (match the PyTorch forward signature) ---------
    def forward_with_kl(self, h_local, h_intermediate, h_global):
        # geometric_alignment defaults to False -> no procrustes_align branch.
        h_stack = jnp.concatenate([h_local, h_intermediate, h_global], axis=0)
        logits_pad, kl_gm, kl_ml = self.forward_stacked(h_stack)
        g, i, l = self.slice_logits(logits_pad)
        return g, i, l, kl_gm, kl_ml

    def forward(self, h_local, h_intermediate, h_global):
        g, i, l, _, _ = self.forward_with_kl(h_local, h_intermediate, h_global)
        return g, i, l


# ----------------------------------------------------------------------------
# Main
# ----------------------------------------------------------------------------
if __name__ == "__main__":
    key = jax.random.PRNGKey(0)
    k_params, k_feat = jax.random.split(key, 2)

    config = {
        "num_global_classes": 4,
        "num_intermediate_classes": 8,
        "num_local_classes": 16,
    }

    B = 8  # multiple of 8 -> tile-aligned static row slices inside the kernel
    # Synthetic multi-scale BERT features, emitted pre-stacked [local | mid | global].
    h_stack = jax.random.normal(k_feat, (3 * B, HIDDEN), jnp.float32)
    h_local = h_stack[0 * B:1 * B]
    h_mid = h_stack[1 * B:2 * B]
    h_global = h_stack[2 * B:3 * B]

    model = MSMAPallas(config, k_params)

    # Hot path: single kernel dispatch, padded lane-dense output + SMEM KL scalars.
    logits_pad, kl_gm, kl_ml = model.forward_stacked(h_stack)
    jax.block_until_ready((logits_pad, kl_gm, kl_ml))

    # Slice lazily at the point of consumption (here: the correctness checks).
    g_logits, i_logits, l_logits = model.slice_logits(logits_pad)

    # --- correctness checks against plain-JAX f32 references -----------------
    ref_g = h_global @ model.w_global + model.b_global
    ref_i = h_mid @ model.w_inter + model.b_inter
    ref_l = h_local @ model.w_local + model.b_local
    # bf16 MXU inputs vs f32 reference -> modest tolerance.
    assert jnp.allclose(g_logits, ref_g, atol=5e-2, rtol=5e-2), "global head mismatch"
    assert jnp.allclose(i_logits, ref_i, atol=5e-2, rtol=5e-2), "intermediate head mismatch"
    assert jnp.allclose(l_logits, ref_l, atol=5e-2, rtol=5e-2), "local head mismatch"

    def kl_ref(h1, h2):
        eps = 1e-6
        dim = h1.shape[1]
        mu1 = jnp.mean(h1, 0)
        s1 = jnp.mean((h1 - mu1[None, :]) ** 2, 0) + eps
        mu2 = jnp.mean(h2, 0)
        s2 = jnp.mean((h2 - mu2[None, :]) ** 2, 0) + eps
        return (0.5 * jnp.sum(s1 / s2)
                + 0.5 * jnp.sum((mu1 - mu2) ** 2 / s2)
                + 0.5 * jnp.sum(jnp.log(s2) - jnp.log(s1))
                - 0.5 * dim)

    # approx reciprocal (EUP) + one-pass moments -> slightly looser tolerance.
    assert jnp.allclose(kl_gm, kl_ref(h_global, h_mid), rtol=2e-2, atol=5e-2), "KL(g,m) mismatch"
    assert jnp.allclose(kl_ml, kl_ref(h_mid, h_local), rtol=2e-2, atol=5e-2), "KL(m,l) mismatch"

    # Standalone compute_kl_divergence kernel agrees with the fused result.
    kl_gm_standalone = compute_kl_divergence(h_global, h_mid)
    jax.block_until_ready(kl_gm_standalone)
    assert jnp.allclose(kl_gm_standalone, kl_gm, rtol=1e-3, atol=1e-2), "standalone KL mismatch"

    # API-compatible path (3 separate features in) matches the stacked hot path.
    g2, i2, l2, kl_gm2, kl_ml2 = model.forward_with_kl(h_local, h_mid, h_global)
    jax.block_until_ready((g2, i2, l2, kl_gm2, kl_ml2))
    assert jnp.allclose(g2, g_logits, atol=1e-5) and jnp.allclose(kl_gm2, kl_gm, atol=1e-4)

    assert g_logits.shape == (B, config["num_global_classes"])
    assert i_logits.shape == (B, config["num_intermediate_classes"])
    assert l_logits.shape == (B, config["num_local_classes"])

    print("KERNEL_OK")
</pallas_src>

<mosaic_0001>
module attributes {stable_mosaic.version = 11 : i64} {
  func.func @_msma_fused_kernel(%arg0: memref<24x768xf32, #tpu.memory_space<vmem>>, %arg1: memref<768x128xbf16, #tpu.memory_space<vmem>>, %arg2: memref<1x128xf32, #tpu.memory_space<vmem>>, %arg3: memref<24x128xf32, #tpu.memory_space<vmem>>, %arg4: memref<2xf32, #tpu.memory_space<smem>>) attributes {dimension_semantics = [], scalar_prefetch = 0 : i64, scratch_operands = 0 : i64, tpu.core_type = #tpu.core_type<tc>} {
    %c0 = arith.constant 0 : index
    %c0_0 = arith.constant 0 : index
    %0 = vector.load %arg0[%c0, %c0_0] : memref<24x768xf32, #tpu.memory_space<vmem>>, vector<24x768xf32>
    %1 = arith.truncf %0 : vector<24x768xf32> to vector<24x768xbf16>
    %c0_1 = arith.constant 0 : index
    %c0_2 = arith.constant 0 : index
    %2 = vector.load %arg1[%c0_1, %c0_2] : memref<768x128xbf16, #tpu.memory_space<vmem>>, vector<768x128xbf16>
    %cst = arith.constant dense<0.000000e+00> : vector<24x128xf32>
    %3 = tpu.matmul %1, %2, %cst {dimension_numbers = #tpu.dot_dimension_numbers<[1], [0], [0], [1], [0, 0, 1, 1], [], []>} : vector<24x768xbf16>, vector<768x128xbf16>, vector<24x128xf32> -> vector<24x128xf32>
    %c0_3 = arith.constant 0 : index
    %c0_4 = arith.constant 0 : index
    %4 = vector.load %arg2[%c0_3, %c0_4] : memref<1x128xf32, #tpu.memory_space<vmem>>, vector<1x128xf32>
    %5 = vector.broadcast %4 : vector<1x128xf32> to vector<24x128xf32>
    %6 = arith.addf %3, %5 : vector<24x128xf32>
    %c0_5 = arith.constant 0 : index
    %c0_6 = arith.constant 0 : index
    %7 = vector.load %arg3[%c0_5, %c0_6] : memref<24x128xf32, #tpu.memory_space<vmem>>, vector<24x128xf32>
    tpu.vector_store %arg3[%c0_5, %c0_6], %6 {strides = array<i32>} : memref<24x128xf32, #tpu.memory_space<vmem>>, vector<24x128xf32>,
    %8 = vector.extract_strided_slice %0 {offsets = [0, 0], sizes = [8, 768], strides = [1, 1]} : vector<24x768xf32> to vector<8x768xf32>
    %9 = vector.extract_strided_slice %0 {offsets = [8, 0], sizes = [8, 768], strides = [1, 1]} : vector<24x768xf32> to vector<8x768xf32>
    %10 = vector.extract_strided_slice %0 {offsets = [16, 0], sizes = [8, 768], strides = [1, 1]} : vector<24x768xf32> to vector<8x768xf32>
    %cst_7 = arith.constant dense<0.000000e+00> : vector<768xf32>
    %11 = vector.multi_reduction <add>, %8, %cst_7 [0] : vector<8x768xf32> to vector<768xf32>
    %12 = vector.shape_cast %11 : vector<768xf32> to vector<1x768xf32>
    %cst_8 = arith.constant 8.000000e+00 : f32
    %13 = vector.broadcast %cst_8 : f32 to vector<1x768xf32>
    %14 = arith.divf %12, %13 : vector<1x768xf32>
    %15 = arith.mulf %8, %8 : vector<8x768xf32>
    %cst_9 = arith.constant dense<0.000000e+00> : vector<768xf32>
    %16 = vector.multi_reduction <add>, %15, %cst_9 [0] : vector<8x768xf32> to vector<768xf32>
    %17 = vector.shape_cast %16 : vector<768xf32> to vector<1x768xf32>
    %cst_10 = arith.constant 8.000000e+00 : f32
    %18 = vector.broadcast %cst_10 : f32 to vector<1x768xf32>
    %19 = arith.divf %17, %18 : vector<1x768xf32>
    %20 = arith.mulf %14, %14 : vector<1x768xf32>
    %21 = arith.subf %19, %20 : vector<1x768xf32>
    %cst_11 = arith.constant 0.000000e+00 : f32
    %22 = vector.broadcast %cst_11 : f32 to vector<1x768xf32>
    %23 = arith.maximumf %21, %22 : vector<1x768xf32>
    %cst_12 = arith.constant 9.99999997E-7 : f32
    %24 = vector.broadcast %cst_12 : f32 to vector<1x768xf32>
    %25 = arith.addf %23, %24 : vector<1x768xf32>
    %26 = math.log %25 : vector<1x768xf32>
    %27 = vector.shape_cast %26 : vector<1x768xf32> to vector<1x1x768xf32>
    %cst_13 = arith.constant dense<0.000000e+00> : vector<1xf32>
    %28 = vector.multi_reduction <add>, %27, %cst_13 [1, 2] : vector<1x1x768xf32> to vector<1xf32>
    %29 = vector.shape_cast %28 : vector<1xf32> to vector<1x1x1xf32>
    %30 = vector.extract %29[0, 0, 0] : f32 from vector<1x1x1xf32>
    %cst_14 = arith.constant dense<0.000000e+00> : vector<768xf32>
    %31 = vector.multi_reduction <add>, %9, %cst_14 [0] : vector<8x768xf32> to vector<768xf32>
    %32 = vector.shape_cast %31 : vector<768xf32> to vector<1x768xf32>
    %cst_15 = arith.constant 8.000000e+00 : f32
    %33 = vector.broadcast %cst_15 : f32 to vector<1x768xf32>
    %34 = arith.divf %32, %33 : vector<1x768xf32>
    %35 = arith.mulf %9, %9 : vector<8x768xf32>
    %cst_16 = arith.constant dense<0.000000e+00> : vector<768xf32>
    %36 = vector.multi_reduction <add>, %35, %cst_16 [0] : vector<8x768xf32> to vector<768xf32>
    %37 = vector.shape_cast %36 : vector<768xf32> to vector<1x768xf32>
    %cst_17 = arith.constant 8.000000e+00 : f32
    %38 = vector.broadcast %cst_17 : f32 to vector<1x768xf32>
    %39 = arith.divf %37, %38 : vector<1x768xf32>
    %40 = arith.mulf %34, %34 : vector<1x768xf32>
    %41 = arith.subf %39, %40 : vector<1x768xf32>
    %cst_18 = arith.constant 0.000000e+00 : f32
    %42 = vector.broadcast %cst_18 : f32 to vector<1x768xf32>
    %43 = arith.maximumf %41, %42 : vector<1x768xf32>
    %cst_19 = arith.constant 9.99999997E-7 : f32
    %44 = vector.broadcast %cst_19 : f32 to vector<1x768xf32>
    %45 = arith.addf %43, %44 : vector<1x768xf32>
    %46 = math.log %45 : vector<1x768xf32>
    %47 = vector.shape_cast %46 : vector<1x768xf32> to vector<1x1x768xf32>
    %cst_20 = arith.constant dense<0.000000e+00> : vector<1xf32>
    %48 = vector.multi_reduction <add>, %47, %cst_20 [1, 2] : vector<1x1x768xf32> to vector<1xf32>
    %49 = vector.shape_cast %48 : vector<1xf32> to vector<1x1x1xf32>
    %50 = vector.extract %49[0, 0, 0] : f32 from vector<1x1x1xf32>
    %cst_21 = arith.constant dense<0.000000e+00> : vector<768xf32>
    %51 = vector.multi_reduction <add>, %10, %cst_21 [0] : vector<8x768xf32> to vector<768xf32>
    %52 = vector.shape_cast %51 : vector<768xf32> to vector<1x768xf32>
    %cst_22 = arith.constant 8.000000e+00 : f32
    %53 = vector.broadcast %cst_22 : f32 to vector<1x768xf32>
    %54 = arith.divf %52, %53 : vector<1x768xf32>
    %55 = arith.mulf %10, %10 : vector<8x768xf32>
    %cst_23 = arith.constant dense<0.000000e+00> : vector<768xf32>
    %56 = vector.multi_reduction <add>, %55, %cst_23 [0] : vector<8x768xf32> to vector<768xf32>
    %57 = vector.shape_cast %56 : vector<768xf32> to vector<1x768xf32>
    %cst_24 = arith.constant 8.000000e+00 : f32
    %58 = vector.broadcast %cst_24 : f32 to vector<1x768xf32>
    %59 = arith.divf %57, %58 : vector<1x768xf32>
    %60 = arith.mulf %54, %54 : vector<1x768xf32>
    %61 = arith.subf %59, %60 : vector<1x768xf32>
    %cst_25 = arith.constant 0.000000e+00 : f32
    %62 = vector.broadcast %cst_25 : f32 to vector<1x768xf32>
    %63 = arith.maximumf %61, %62 : vector<1x768xf32>
    %cst_26 = arith.constant 9.99999997E-7 : f32
    %64 = vector.broadcast %cst_26 : f32 to vector<1x768xf32>
    %65 = arith.addf %63, %64 : vector<1x768xf32>
    %66 = math.log %65 : vector<1x768xf32>
    %67 = vector.shape_cast %66 : vector<1x768xf32> to vector<1x1x768xf32>
    %cst_27 = arith.constant dense<0.000000e+00> : vector<1xf32>
    %68 = vector.multi_reduction <add>, %67, %cst_27 [1, 2] : vector<1x1x768xf32> to vector<1xf32>
    %69 = vector.shape_cast %68 : vector<1xf32> to vector<1x1x1xf32>
    %70 = vector.extract %69[0, 0, 0] : f32 from vector<1x1x1xf32>
    %71 = tpu.reciprocal %45 {approx = true} : vector<1x768xf32> -> vector<1x768xf32>
    %72 = tpu.reciprocal %25 {approx = true} : vector<1x768xf32> -> vector<1x768xf32>
    %73 = arith.subf %54, %34 : vector<1x768xf32>
    %74 = arith.mulf %73, %73 : vector<1x768xf32>
    %75 = arith.addf %65, %74 : vector<1x768xf32>
    %76 = arith.mulf %75, %71 : vector<1x768xf32>
    %77 = vector.shape_cast %76 : vector<1x768xf32> to vector<1x1x768xf32>
    %cst_28 = arith.constant dense<0.000000e+00> : vector<1xf32>
    %78 = vector.multi_reduction <add>, %77, %cst_28 [1, 2] : vector<1x1x768xf32> to vector<1xf32>
    %79 = vector.shape_cast %78 : vector<1xf32> to vector<1x1x1xf32>
    %80 = vector.extract %79[0, 0, 0] : f32 from vector<1x1x1xf32>
    %81 = arith.subf %50, %70 : f32
    %82 = arith.addf %80, %81 : f32
    %cst_29 = arith.constant 7.680000e+02 : f32
    %83 = arith.subf %82, %cst_29 : f32
    %cst_30 = arith.constant 5.000000e-01 : f32
    %84 = arith.mulf %cst_30, %83 : f32
    %c0_31 = arith.constant 0 : index
    %85 = memref.load %arg4[%c0_31] : memref<2xf32, #tpu.memory_space<smem>>
    memref.store %84, %arg4[%c0_31] : memref<2xf32, #tpu.memory_space<smem>>
    %86 = arith.subf %34, %14 : vector<1x768xf32>
    %87 = arith.mulf %86, %86 : vector<1x768xf32>
    %88 = arith.addf %45, %87 : vector<1x768xf32>
    %89 = arith.mulf %88, %72 : vector<1x768xf32>
    %90 = vector.shape_cast %89 : vector<1x768xf32> to vector<1x1x768xf32>
    %cst_32 = arith.constant dense<0.000000e+00> : vector<1xf32>
    %91 = vector.multi_reduction <add>, %90, %cst_32 [1, 2] : vector<1x1x768xf32> to vector<1xf32>
    %92 = vector.shape_cast %91 : vector<1xf32> to vector<1x1x1xf32>
    %93 = vector.extract %92[0, 0, 0] : f32 from vector<1x1x1xf32>
    %94 = arith.subf %30, %50 : f32
    %95 = arith.addf %93, %94 : f32
    %cst_33 = arith.constant 7.680000e+02 : f32
    %96 = arith.subf %95, %cst_33 : f32
    %cst_34 = arith.constant 5.000000e-01 : f32
    %97 = arith.mulf %cst_34, %96 : f32
    %c1 = arith.constant 1 : index
    %98 = memref.load %arg4[%c1] : memref<2xf32, #tpu.memory_space<smem>>
    memref.store %97, %arg4[%c1] : memref<2xf32, #tpu.memory_space<smem>>
    return
  }
}

</mosaic_0001>

<llo_original>
// kernel: fwd.1
$region0: #{fwd.1}
  #allocation0 [shape = 'u32[]', space=smem, size = 0x4, offset = 0x4, fixed_abs, tag = 'smem constant byte address 0x4 - core index']
  #allocation1 [shape = 'u32[144,128]{1,0:T(1,128)}', space=vmem, size = 0x12000, scoped, tag = 'internal scratch']
  %s0 = inlined_call_operand.hbm [shape: f32[24,768], index: 0, kind: input, shape index: {}]
  %s1 = inlined_call_operand.hbm [shape: bf16[768,128], index: 1, kind: input, shape index: {}]
  %s2 = inlined_call_operand.vmem [shape: f32[1,128], index: 2, kind: input, shape index: {}]
  %s3 = inlined_call_operand.hbm [shape: f32[24,128], index: 3, kind: output, shape index: {0}]
  %s4 = inlined_call_operand.hbm [shape: f32[2], index: 4, kind: output, shape index: {1}]
  %5 = xla_tuple %s3, %s4
  %s6 = sld [smem:[#allocation0]]
  $region38: #{fwd.1} parent=0
    _
  %s8 = ssub.s32 1, %s6
  %s9 = scalar_select 0, %s8, %s6
  $region1: #{fwd.1} parent=0
    #allocation2 [shape = 'u8[73728]{0}', space=vmem, size = 0x12000, scoped, tag = 'input window, operand 0, single buffered']
    #allocation3 [shape = 's32[1]{0}', space=sflag, size = 0x4, scoped, tag = 'scoped memory for fwd.1']
    #allocation4 [shape = 's32[1]{0}', space=sflag, size = 0x4, scoped, tag = 'scoped memory for fwd.1']
    #allocation5 [shape = 's32[1]{0}', space=sflag, size = 0x4, scoped, tag = 'scoped memory for fwd.1']
    #allocation6 [shape = 'u8[196608]{0}', space=vmem, size = 0x30000, scoped, tag = 'input window, operand 1, single buffered']
    #allocation7 [shape = 's32[1]{0}', space=sflag, size = 0x4, scoped, tag = 'scoped memory for fwd.1']
    #allocation8 [shape = 'u8[12288]{0}', space=vmem, size = 0x3000, scoped, tag = 'output window, operand 0, single buffered']
    #allocation9 [shape = 'u8[512]{0}', space=smem, size = 0x200, scoped, tag = 'output window, operand 1, single buffered']
    %10 = vsyncpa [#allocation3], 0
    %11 = vsyncpa [#allocation7], 0
    %12 = vsyncpa [#allocation4], 0
    %13 = vsyncpa [#allocation5], 0
    // Predicated region
    $region2: #{fwd.1} parent=1 // pred_check
      _
    $region3: #{fwd.1} parent=1 // pred_check_branch
      %15 = sbr.rel (0) target = $region5
    $region4: #{fwd.1} parent=1 // pred_region
      %s17 = ssub.s32 2304, 2304
      %18 = vsyncadd [#allocation3], %s17
      %s19 = sshll.u32 [#allocation2], 4
      %s20 = int_to_ptr.vmem [resolvable:$true] %s19
      %25 = dma.hbm_to_vmem [thread:$0]  %s0, 2304, %s20, [#allocation3], 768, 768, 48
    $region5: #{fwd.1} parent=1 // pred_fallthru
      _
    // Predicated region
    $region6: #{fwd.1} parent=1 // pred_check
      _
    $region7: #{fwd.1} parent=1 // pred_check_branch
      %27 = sbr.rel (0) target = $region9
    $region8: #{fwd.1} parent=1 // pred_region
      %s29 = ssub.s32 6144, 6144
      %30 = vsyncadd [#allocation7], %s29
      %s31 = sshll.u32 [#allocation6], 4
      %s32 = int_to_ptr.vmem [resolvable:$true] %s31
      %37 = dma.hbm_to_vmem [thread:$0]  %s1, 6144, %s32, [#allocation7], 64, 64, 4
    $region9: #{fwd.1} parent=1 // pred_fallthru
      _
    // Predicated region
    $region10: #{fwd.1} parent=1 // pred_check
      _
    $region11: #{fwd.1} parent=1 // pred_check_branch
      %39 = sbr.rel (0) target = $region13
    $region12: #{fwd.1} parent=1 // pred_region
      _
    $region13: #{fwd.1} parent=1 // pred_fallthru
      _
    // Predicated region
    $region14: #{fwd.1} parent=1 // pred_check
      _
    $region15: #{fwd.1} parent=1 // pred_check_branch
      %41 = sbr.rel (0) target = $region17
    $region16: #{fwd.1} parent=1 // pred_region
      %42 = dma.done [#allocation3], 2304
    $region17: #{fwd.1} parent=1 // pred_fallthru
      _
    // Predicated region
    $region18: #{fwd.1} parent=1 // pred_check
      _
    $region19: #{fwd.1} parent=1 // pred_check_branch
      %44 = sbr.rel (0) target = $region21
    $region20: #{fwd.1} parent=1 // pred_region
      %45 = dma.done [#allocation7], 6144
    $region21: #{fwd.1} parent=1 // pred_fallthru
      _
    %v47 = vld [vmem:[#allocation2] sm:$0xff]
    %v48 = vld [vmem:[#allocation2 + $0x8] sm:$0xff]
    %v49 = vld [vmem:[#allocation2 + $0x10] sm:$0xff]
    %v50 = vld [vmem:[#allocation2 + $0x18] sm:$0xff]
    %v51 = vld [vmem:[#allocation2 + $0x20] sm:$0xff]
    %v52 = vld [vmem:[#allocation2 + $0x28] sm:$0xff]
    %v53 = vld [vmem:[#allocation2 + $0x30] sm:$0xff]
    %v54 = vld [vmem:[#allocation2 + $0x38] sm:$0xff]
    %v55 = vld [vmem:[#allocation2 + $0x40] sm:$0xff]
    %v56 = vld [vmem:[#allocation2 + $0x48] sm:$0xff]
    %v57 = vld [vmem:[#allocation2 + $0x50] sm:$0xff]
    %v58 = vld [vmem:[#allocation2 + $0x58] sm:$0xff]
    %v59 = vld [vmem:[#allocation2 + $0x60] sm:$0xff]
    %v60 = vld [vmem:[#allocation2 + $0x68] sm:$0xff]
    %v61 = vld [vmem:[#allocation2 + $0x70] sm:$0xff]
    %v62 = vld [vmem:[#allocation2 + $0x78] sm:$0xff]
    %v63 = vld [vmem:[#allocation2 + $0x80] sm:$0xff]
    %v64 = vld [vmem:[#allocation2 + $0x88] sm:$0xff]
    %v65 = vpack.c.bf16 %v53, %v47
    %v66 = vpack.c.bf16 %v54, %v48
    %v67 = vpack.c.bf16 %v55, %v49
    %v68 = vpack.c.bf16 %v56, %v50
    %v69 = vpack.c.bf16 %v57, %v51
    %v70 = vpack.c.bf16 %v58, %v52
    %v71 = vpack.c.bf16 %v59, %v59
    %v72 = vpack.c.bf16 %v60, %v60
    %v73 = vpack.c.bf16 %v61, %v61
    %v74 = vpack.c.bf16 %v62, %v62
    %v75 = vpack.c.bf16 %v63, %v63
    %v76 = vpack.c.bf16 %v64, %v64
    %v77 = vld [vmem:[#allocation6] sm:$0xf]
    %v78 = vld [vmem:[#allocation6 + $0x4] sm:$0xf]
    %v79 = vld [vmem:[#allocation6 + $0x8] sm:$0xf]
    %v80 = vld [vmem:[#allocation6 + $0xc] sm:$0xf]
    %v81 = vld [vmem:[#allocation6 + $0x10] sm:$0xf]
    %v82 = vld [vmem:[#allocation6 + $0x14] sm:$0xf]
    %v83 = vld [vmem:[#allocation6 + $0x18] sm:$0xf]
    %v84 = vld [vmem:[#allocation6 + $0x1c] sm:$0xf]
    %v85 = vld [vmem:[#allocation6 + $0x20] sm:$0xf]
    %v86 = vld [vmem:[#allocation6 + $0x24] sm:$0xf]
    %v87 = vld [vmem:[#allocation6 + $0x28] sm:$0xf]
    %v88 = vld [vmem:[#allocation6 + $0x2c] sm:$0xf]
    %v89 = vld [vmem:[#allocation6 + $0x30] sm:$0xf]
    %v90 = vld [vmem:[#allocation6 + $0x34] sm:$0xf]
    %v91 = vld [vmem:[#allocation6 + $0x38] sm:$0xf]
    %v92 = vld [vmem:[#allocation6 + $0x3c] sm:$0xf]
    %v93 = vld [vmem:[#allocation6 + $0x40] sm:$0xf]
    %v94 = vld [vmem:[#allocation6 + $0x44] sm:$0xf]
    %v95 = vld [vmem:[#allocation6 + $0x48] sm:$0xf]
    %v96 = vld [vmem:[#allocation6 + $0x4c] sm:$0xf]
    %v97 = vld [vmem:[#allocation6 + $0x50] sm:$0xf]
    %v98 = vld [vmem:[#allocation6 + $0x54] sm:$0xf]
    %v99 = vld [vmem:[#allocation6 + $0x58] sm:$0xf]
    %v100 = vld [vmem:[#allocation6 + $0x5c] sm:$0xf]
    %v101 = vld [vmem:[#allocation6 + $0x60] sm:$0xf]
    %v102 = vld [vmem:[#allocation6 + $0x64] sm:$0xf]
    %v103 = vld [vmem:[#allocation6 + $0x68] sm:$0xf]
    %v104 = vld [vmem:[#allocation6 + $0x6c] sm:$0xf]
    %v105 = vld [vmem:[#allocation6 + $0x70] sm:$0xf]
    %v106 = vld [vmem:[#allocation6 + $0x74] sm:$0xf]
    %v107 = vld [vmem:[#allocation6 + $0x78] sm:$0xf]
    %v108 = vld [vmem:[#allocation6 + $0x7c] sm:$0xf]
    %v109 = vld [vmem:[#allocation6 + $0x80] sm:$0xf]
    %v110 = vld [vmem:[#allocation6 + $0x84] sm:$0xf]
    %v111 = vld [vmem:[#allocation6 + $0x88] sm:$0xf]
    %v112 = vld [vmem:[#allocation6 + $0x8c] sm:$0xf]
    %v113 = vld [vmem:[#allocation6 + $0x90] sm:$0xf]
    %v114 = vld [vmem:[#allocation6 + $0x94] sm:$0xf]
    %v115 = vld [vmem:[#allocation6 + $0x98] sm:$0xf]
    %v116 = vld [vmem:[#allocation6 + $0x9c] sm:$0xf]
    %v117 = vld [vmem:[#allocation6 + $0xa0] sm:$0xf]
    %v118 = vld [vmem:[#allocation6 + $0xa4] sm:$0xf]
    %v119 = vld [vmem:[#allocation6 + $0xa8] sm:$0xf]
    %v120 = vld [vmem:[#allocation6 + $0xac] sm:$0xf]
    %v121 = vld [vmem:[#allocation6 + $0xb0] sm:$0xf]
    %v122 = vld [vmem:[#allocation6 + $0xb4] sm:$0xf]
    %v123 = vld [vmem:[#allocation6 + $0xb8] sm:$0xf]
    %v124 = vld [vmem:[#allocation6 + $0xbc] sm:$0xf]
    %v125 = vld [vmem:[#allocation6 + $0xc0] sm:$0xf]
    %v126 = vld [vmem:[#allocation6 + $0xc4] sm:$0xf]
    %v127 = vld [vmem:[#allocation6 + $0xc8] sm:$0xf]
    %v128 = vld [vmem:[#allocation6 + $0xcc] sm:$0xf]
    %v129 = vld [vmem:[#allocation6 + $0xd0] sm:$0xf]
    %v130 = vld [vmem:[#allocation6 + $0xd4] sm:$0xf]
    %v131 = vld [vmem:[#allocation6 + $0xd8] sm:$0xf]
    %v132 = vld [vmem:[#allocation6 + $0xdc] sm:$0xf]
    %v133 = vld [vmem:[#allocation6 + $0xe0] sm:$0xf]
    %v134 = vld [vmem:[#allocation6 + $0xe4] sm:$0xf]
    %v135 = vld [vmem:[#allocation6 + $0xe8] sm:$0xf]
    %v136 = vld [vmem:[#allocation6 + $0xec] sm:$0xf]
    %v137 = vld [vmem:[#allocation6 + $0xf0] sm:$0xf]
    %v138 = vld [vmem:[#allocation6 + $0xf4] sm:$0xf]
    %v139 = vld [vmem:[#allocation6 + $0xf8] sm:$0xf]
    %v140 = vld [vmem:[#allocation6 + $0xfc] sm:$0xf]
    %v141 = vld [vmem:[#allocation6 + $0x100] sm:$0xf]
    %v142 = vld [vmem:[#allocation6 + $0x104] sm:$0xf]
    %v143 = vld [vmem:[#allocation6 + $0x108] sm:$0xf]
    %v144 = vld [vmem:[#allocation6 + $0x10c] sm:$0xf]
    %v145 = vld [vmem:[#allocation6 + $0x110] sm:$0xf]
    %v146 = vld [vmem:[#allocation6 + $0x114] sm:$0xf]
    %v147 = vld [vmem:[#allocation6 + $0x118] sm:$0xf]
    %v148 = vld [vmem:[#allocation6 + $0x11c] sm:$0xf]
    %v149 = vld [vmem:[#allocation6 + $0x120] sm:$0xf]
    %v150 = vld [vmem:[#allocation6 + $0x124] sm:$0xf]
    %v151 = vld [vmem:[#allocation6 + $0x128] sm:$0xf]
    %v152 = vld [vmem:[#allocation6 + $0x12c] sm:$0xf]
    %v153 = vld [vmem:[#allocation6 + $0x130] sm:$0xf]
    %v154 = vld [vmem:[#allocation6 + $0x134] sm:$0xf]
    %v155 = vld [vmem:[#allocation6 + $0x138] sm:$0xf]
    %v156 = vld [vmem:[#allocation6 + $0x13c] sm:$0xf]
    %v157 = vld [vmem:[#allocation6 + $0x140] sm:$0xf]
    %v158 = vld [vmem:[#allocation6 + $0x144] sm:$0xf]
    %v159 = vld [vmem:[#allocation6 + $0x148] sm:$0xf]
    %v160 = vld [vmem:[#allocation6 + $0x14c] sm:$0xf]
    %v161 = vld [vmem:[#allocation6 + $0x150] sm:$0xf]
    %v162 = vld [vmem:[#allocation6 + $0x154] sm:$0xf]
    %v163 = vld [vmem:[#allocation6 + $0x158] sm:$0xf]
    %v164 = vld [vmem:[#allocation6 + $0x15c] sm:$0xf]
    %v165 = vld [vmem:[#allocation6 + $0x160] sm:$0xf]
    %v166 = vld [vmem:[#allocation6 + $0x164] sm:$0xf]
    %v167 = vld [vmem:[#allocation6 + $0x168] sm:$0xf]
    %v168 = vld [vmem:[#allocation6 + $0x16c] sm:$0xf]
    %v169 = vld [vmem:[#allocation6 + $0x170] sm:$0xf]
    %v170 = vld [vmem:[#allocation6 + $0x174] sm:$0xf]
    %v171 = vld [vmem:[#allocation6 + $0x178] sm:$0xf]
    %v172 = vld [vmem:[#allocation6 + $0x17c] sm:$0xf]
    %v173 = vld [vmem:[%s2] sm:$0x1]
    %v175 = vlaneseq
    %v176 = vshrl.u32 %v175, 7
    %v177 = vsub.s32 0, %v176
    %v178 = vrot.slane %v173, %v177
    %v276 = vunpack.c.l.b16 %v77
    %v277 = vunpack.c.l.b16 %v78
    %v278 = vunpack.c.l.b16 %v79
    %v279 = vunpack.c.l.b16 %v80
    %v280 = vunpack.c.l.b16 %v81
    %v281 = vunpack.c.l.b16 %v82
    %v282 = vunpack.c.l.b16 %v83
    %v283 = vunpack.c.l.b16 %v84
    %v284 = vunpack.c.l.b16 %v85
    %v285 = vunpack.c.l.b16 %v86
    %v286 = vunpack.c.l.b16 %v87
    %v287 = vunpack.c.l.b16 %v88
    %v288 = vunpack.c.l.b16 %v89
    %v289 = vunpack.c.l.b16 %v90
    %v290 = vunpack.c.l.b16 %v91
    %v291 = vunpack.c.l.b16 %v92
    %v292 = vunpack.c.l.b16 %v93
    %v293 = vunpack.c.l.b16 %v94
    %v294 = vunpack.c.l.b16 %v95
    %v295 = vunpack.c.l.b16 %v96
    %v296 = vunpack.c.l.b16 %v97
    %v297 = vunpack.c.l.b16 %v98
    %v298 = vunpack.c.l.b16 %v99
    %v299 = vunpack.c.l.b16 %v100
    %v300 = vunpack.c.l.b16 %v101
    %v301 = vunpack.c.l.b16 %v102
    %v302 = vunpack.c.l.b16 %v103
    %v303 = vunpack.c.l.b16 %v104
    %v304 = vunpack.c.l.b16 %v105
    %v305 = vunpack.c.l.b16 %v106
    %v306 = vunpack.c.l.b16 %v107
    %v307 = vunpack.c.l.b16 %v108
    %v308 = vunpack.c.l.b16 %v109
    %v309 = vunpack.c.l.b16 %v110
    %v310 = vunpack.c.l.b16 %v111
    %v311 = vunpack.c.l.b16 %v112
    %v312 = vunpack.c.l.b16 %v113
    %v313 = vunpack.c.l.b16 %v114
    %v314 = vunpack.c.l.b16 %v115
    %v315 = vunpack.c.l.b16 %v116
    %v316 = vunpack.c.l.b16 %v117
    %v317 = vunpack.c.l.b16 %v118
    %v318 = vunpack.c.l.b16 %v119
    %v319 = vunpack.c.l.b16 %v120
    %v320 = vunpack.c.l.b16 %v121
    %v321 = vunpack.c.l.b16 %v122
    %v322 = vunpack.c.l.b16 %v123
    %v323 = vunpack.c.l.b16 %v124
    %v324 = vunpack.c.l.b16 %v125
    %v325 = vunpack.c.l.b16 %v126
    %v326 = vunpack.c.l.b16 %v127
    %v327 = vunpack.c.l.b16 %v128
    %v328 = vunpack.c.l.b16 %v129
    %v329 = vunpack.c.l.b16 %v130
    %v330 = vunpack.c.l.b16 %v131
    %v331 = vunpack.c.l.b16 %v132
    %v332 = vunpack.c.l.b16 %v133
    %v333 = vunpack.c.l.b16 %v134
    %v334 = vunpack.c.l.b16 %v135
    %v335 = vunpack.c.l.b16 %v136
    %v336 = vunpack.c.l.b16 %v137
    %v337 = vunpack.c.l.b16 %v138
    %v338 = vunpack.c.l.b16 %v139
    %v339 = vunpack.c.l.b16 %v140
    %v340 = vunpack.c.l.b16 %v141
    %v341 = vunpack.c.l.b16 %v142
    %v342 = vunpack.c.l.b16 %v143
    %v343 = vunpack.c.l.b16 %v144
    %v344 = vunpack.c.l.b16 %v145
    %v345 = vunpack.c.l.b16 %v146
    %v346 = vunpack.c.l.b16 %v147
    %v347 = vunpack.c.l.b16 %v148
    %v348 = vunpack.c.l.b16 %v149
    %v349 = vunpack.c.l.b16 %v150
    %v350 = vunpack.c.l.b16 %v151
    %v351 = vunpack.c.l.b16 %v152
    %v352 = vunpack.c.l.b16 %v153
    %v353 = vunpack.c.l.b16 %v154
    %v354 = vunpack.c.l.b16 %v155
    %v355 = vunpack.c.l.b16 %v156
    %v356 = vunpack.c.l.b16 %v157
    %v357 = vunpack.c.l.b16 %v158
    %v358 = vunpack.c.l.b16 %v159
    %v359 = vunpack.c.l.b16 %v160
    %v360 = vunpack.c.l.b16 %v161
    %v361 = vunpack.c.l.b16 %v162
    %v362 = vunpack.c.l.b16 %v163
    %v363 = vunpack.c.l.b16 %v164
    %v364 = vunpack.c.l.b16 %v165
    %v365 = vunpack.c.l.b16 %v166
    %v366 = vunpack.c.l.b16 %v167
    %v367 = vunpack.c.l.b16 %v168
    %v368 = vunpack.c.l.b16 %v169
    %v369 = vunpack.c.l.b16 %v170
    %v370 = vunpack.c.l.b16 %v171
    %v371 = vunpack.c.l.b16 %v172
    %v372 = vpack.c.b16 %v277, %v276
    %v373 = vpack.c.b16 %v279, %v278
    %v374 = vpack.c.b16 %v281, %v280
    %v375 = vpack.c.b16 %v283, %v282
    %v376 = vpack.c.b16 %v285, %v284
    %v377 = vpack.c.b16 %v287, %v286
    %v378 = vpack.c.b16 %v289, %v288
    %v379 = vpack.c.b16 %v291, %v290
    %v380 = vpack.c.b16 %v293, %v292
    %v381 = vpack.c.b16 %v295, %v294
    %v382 = vpack.c.b16 %v297, %v296
    %v383 = vpack.c.b16 %v299, %v298
    %v384 = vpack.c.b16 %v301, %v300
    %v385 = vpack.c.b16 %v303, %v302
    %v386 = vpack.c.b16 %v305, %v304
    %v387 = vpack.c.b16 %v307, %v306
    %v388 = vpack.c.b16 %v309, %v308
    %v389 = vpack.c.b16 %v311, %v310
    %v390 = vpack.c.b16 %v313, %v312
    %v391 = vpack.c.b16 %v315, %v314
    %v392 = vpack.c.b16 %v317, %v316
    %v393 = vpack.c.b16 %v319, %v318
    %v394 = vpack.c.b16 %v321, %v320
    %v395 = vpack.c.b16 %v323, %v322
    %v396 = vpack.c.b16 %v325, %v324
    %v397 = vpack.c.b16 %v327, %v326
    %v398 = vpack.c.b16 %v329, %v328
    %v399 = vpack.c.b16 %v331, %v330
    %v400 = vpack.c.b16 %v333, %v332
    %v401 = vpack.c.b16 %v335, %v334
    %v402 = vpack.c.b16 %v337, %v336
    %v403 = vpack.c.b16 %v339, %v338
    %v404 = vpack.c.b16 %v341, %v340
    %v405 = vpack.c.b16 %v343, %v342
    %v406 = vpack.c.b16 %v345, %v344
    %v407 = vpack.c.b16 %v347, %v346
    %v408 = vpack.c.b16 %v349, %v348
    %v409 = vpack.c.b16 %v351, %v350
    %v410 = vpack.c.b16 %v353, %v352
    %v411 = vpack.c.b16 %v355, %v354
    %v412 = vpack.c.b16 %v357, %v356
    %v413 = vpack.c.b16 %v359, %v358
    %v414 = vpack.c.b16 %v361, %v360
    %v415 = vpack.c.b16 %v363, %v362
    %v416 = vpack.c.b16 %v365, %v364
    %v417 = vpack.c.b16 %v367, %v366
    %v418 = vpack.c.b16 %v369, %v368
    %v419 = vpack.c.b16 %v371, %v370
    %468 = vmatprep.subr.bf16.mxu0 0
    %469 = vmatpush1.bf16.msra.mxu0 %v372
    %470 = vmatprep.subr.bf16.mxu0 0
    %471 = vmatpush1.bf16.msra.mxu0 %v373
    %472 = vmatprep.subr.bf16.mxu0 0
    %473 = vmatpush1.bf16.msra.mxu0 %v374
    %474 = vmatprep.subr.bf16.mxu0 0
    %475 = vmatpush1.bf16.msra.mxu0 %v375
    %476 = vmatprep.subr.bf16.mxu0 0
    %477 = vmatpush1.bf16.msra.mxu0 %v376
    %478 = vmatprep.subr.bf16.mxu0 0
    %479 = vmatpush1.bf16.msra.mxu0 %v377
    %480 = vmatprep.subr.bf16.mxu0 0
    %481 = vmatpush1.bf16.msra.mxu0 %v378
    %482 = vmatprep.subr.bf16.mxu0 0
    %483 = vmatpush1.bf16.msra.mxu0 %v379
    %484 = vmatprep.subr.bf16.mxu0 0
    %485 = vmatpush1.bf16.msra.mxu0 %v380
    %486 = vmatprep.subr.bf16.mxu0 0
    %487 = vmatpush1.bf16.msra.mxu0 %v381
    %488 = vmatprep.subr.bf16.mxu0 0
    %489 = vmatpush1.bf16.msra.mxu0 %v382
    %490 = vmatprep.subr.bf16.mxu0 0
    %491 = vmatpush1.bf16.msra.mxu0 %v383
    %492 = vmatprep.subr.bf16.mxu0 0
    %493 = vmatpush1.bf16.msra.mxu0 %v384
    %494 = vmatprep.subr.bf16.mxu0 0
    %495 = vmatpush1.bf16.msra.mxu0 %v385
    %496 = vmatprep.subr.bf16.mxu0 0
    %497 = vmatpush1.bf16.msra.mxu0 %v386
    %498 = vmatprep.subr.bf16.mxu0 0
    %499 = vmatpush1.bf16.msra.mxu0 %v387
    %500 = vmatprep.mubr.bf16.mxu0 %v66
    %501 = vmatmul.mubr.bf16.gmra.mrb[0].mxu0 %v65
    %v502 = vpop.f32.mrb[0].mxu0
    %v503 = vadd.f32 %v178, %v502
    %v504 = vpop.f32.mrb[0].mxu0
    %v505 = vpop.f32.mrb[0].mxu0
    %v506 = vadd.f32 %v178, %v505
    %v507 = vpop.f32.mrb[0].mxu0
    %508 = vmatprep.mubr.bf16.mxu0 %v72
    %509 = vmatmul.mubr.bf16.gmra.mrb[0].mxu0 %v71
    %v510 = vpop.f32.mrb[0].mxu0
    %v511 = vadd.f32 %v178, %v510
    %v512 = vpop.f32.mrb[0].mxu0
    %v513 = vpop.f32.mrb[0].mxu0
    %v514 = vpop.f32.mrb[0].mxu0
    %515 = vdwg.mxu0
    %516 = vmatprep.subr.bf16.mxu0 0
    %517 = vmatpush1.bf16.msra.mxu0 %v388
    %518 = vmatprep.subr.bf16.mxu0 0
    %519 = vmatpush1.bf16.msra.mxu0 %v389
    %520 = vmatprep.subr.bf16.mxu0 0
    %521 = vmatpush1.bf16.msra.mxu0 %v390
    %522 = vmatprep.subr.bf16.mxu0 0
    %523 = vmatpush1.bf16.msra.mxu0 %v391
    %524 = vmatprep.subr.bf16.mxu0 0
    %525 = vmatpush1.bf16.msra.mxu0 %v392
    %526 = vmatprep.subr.bf16.mxu0 0
    %527 = vmatpush1.bf16.msra.mxu0 %v393
    %528 = vmatprep.subr.bf16.mxu0 0
    %529 = vmatpush1.bf16.msra.mxu0 %v394
    %530 = vmatprep.subr.bf16.mxu0 0
    %531 = vmatpush1.bf16.msra.mxu0 %v395
    %532 = vmatprep.subr.bf16.mxu0 0
    %533 = vmatpush1.bf16.msra.mxu0 %v396
    %534 = vmatprep.subr.bf16.mxu0 0
    %535 = vmatpush1.bf16.msra.mxu0 %v397
    %536 = vmatprep.subr.bf16.mxu0 0
    %537 = vmatpush1.bf16.msra.mxu0 %v398
    %538 = vmatprep.subr.bf16.mxu0 0
    %539 = vmatpush1.bf16.msra.mxu0 %v399
    %540 = vmatprep.subr.bf16.mxu0 0
    %541 = vmatpush1.bf16.msra.mxu0 %v400
    %542 = vmatprep.subr.bf16.mxu0 0
    %543 = vmatpush1.bf16.msra.mxu0 %v401
    %544 = vmatprep.subr.bf16.mxu0 0
    %545 = vmatpush1.bf16.msra.mxu0 %v402
    %546 = vmatprep.subr.bf16.mxu0 0
    %547 = vmatpush1.bf16.msra.mxu0 %v403
    %548 = vmatprep.mubr.bf16.mxu0 %v68
    %549 = vmatmul.mubr.bf16.gmra.mrb[0].mxu0 %v67
    %v550 = vpop.f32.mrb[0].mxu0
    %v551 = vadd.f32 %v503, %v550
    %v552 = vpop.f32.mrb[0].mxu0
    %v553 = vpop.f32.mrb[0].mxu0
    %v554 = vadd.f32 %v506, %v553
    %v555 = vpop.f32.mrb[0].mxu0
    %556 = vmatprep.mubr.bf16.mxu0 %v74
    %557 = vmatmul.mubr.bf16.gmra.mrb[0].mxu0 %v73
    %v558 = vpop.f32.mrb[0].mxu0
    %v559 = vadd.f32 %v511, %v558
    %v560 = vpop.f32.mrb[0].mxu0
    %v561 = vpop.f32.mrb[0].mxu0
    %v562 = vpop.f32.mrb[0].mxu0
    %563 = vdwg.mxu0
    %564 = vmatprep.subr.bf16.mxu0 0
    %565 = vmatpush1.bf16.msra.mxu0 %v404
    %566 = vmatprep.subr.bf16.mxu0 0
    %567 = vmatpush1.bf16.msra.mxu0 %v405
    %568 = vmatprep.subr.bf16.mxu0 0
    %569 = vmatpush1.bf16.msra.mxu0 %v406
    %570 = vmatprep.subr.bf16.mxu0 0
    %571 = vmatpush1.bf16.msra.mxu0 %v407
    %572 = vmatprep.subr.bf16.mxu0 0
    %573 = vmatpush1.bf16.msra.mxu0 %v408
    %574 = vmatprep.subr.bf16.mxu0 0
    %575 = vmatpush1.bf16.msra.mxu0 %v409
    %576 = vmatprep.subr.bf16.mxu0 0
    %577 = vmatpush1.bf16.msra.mxu0 %v410
    %578 = vmatprep.subr.bf16.mxu0 0
    %579 = vmatpush1.bf16.msra.mxu0 %v411
    %580 = vmatprep.subr.bf16.mxu0 0
    %581 = vmatpush1.bf16.msra.mxu0 %v412
    %582 = vmatprep.subr.bf16.mxu0 0
    %583 = vmatpush1.bf16.msra.mxu0 %v413
    %584 = vmatprep.subr.bf16.mxu0 0
    %585 = vmatpush1.bf16.msra.mxu0 %v414
    %586 = vmatprep.subr.bf16.mxu0 0
    %587 = vmatpush1.bf16.msra.mxu0 %v415
    %588 = vmatprep.subr.bf16.mxu0 0
    %589 = vmatpush1.bf16.msra.mxu0 %v416
    %590 = vmatprep.subr.bf16.mxu0 0
    %591 = vmatpush1.bf16.msra.mxu0 %v417
    %592 = vmatprep.subr.bf16.mxu0 0
    %593 = vmatpush1.bf16.msra.mxu0 %v418
    %594 = vmatprep.subr.bf16.mxu0 0
    %595 = vmatpush1.bf16.msra.mxu0 %v419
    %596 = vmatprep.mubr.bf16.mxu0 %v70
    %597 = vmatmul.mubr.bf16.gmra.mrb[0].mxu0 %v69
    %v598 = vpop.f32.mrb[0].mxu0
    %v599 = vadd.f32 %v551, %v598
    %v600 = vpop.f32.mrb[0].mxu0
    %v601 = vpop.f32.mrb[0].mxu0
    %v602 = vadd.f32 %v554, %v601
    %v603 = vpop.f32.mrb[0].mxu0
    %604 = vmatprep.mubr.bf16.mxu0 %v76
    %605 = vmatmul.mubr.bf16.gmra.mrb[0].mxu0 %v75
    %v606 = vpop.f32.mrb[0].mxu0
    %v607 = vadd.f32 %v559, %v606
    %v608 = vpop.f32.mrb[0].mxu0
    %v609 = vpop.f32.mrb[0].mxu0
    %v610 = vpop.f32.mrb[0].mxu0
    %611 = vdwg.mxu0
    %612 = vst [vmem:[#allocation8] sm:$0xff] %v599
    %613 = vst [vmem:[#allocation8 + $0x8] sm:$0xff] %v602
    %614 = vst [vmem:[#allocation8 + $0x10] sm:$0xff] %v607
    %v615 = vrot.slane %v47, 4
    %v616 = vadd.f32 %v47, %v615
    %v617 = vrot.slane %v616, 2
    %v618 = vadd.f32 %v616, %v617
    %v619 = vrot.slane %v618, 1
    %v620 = vadd.f32 %v618, %v619
    %v621 = vrot.slane %v48, 4
    %v622 = vadd.f32 %v48, %v621
    %v623 = vrot.slane %v622, 2
    %v624 = vadd.f32 %v622, %v623
    %v625 = vrot.slane %v624, 1
    %v626 = vadd.f32 %v624, %v625
    %v627 = vrot.slane %v49, 4
    %v628 = vadd.f32 %v49, %v627
    %v629 = vrot.slane %v628, 2
    %v630 = vadd.f32 %v628, %v629
    %v631 = vrot.slane %v630, 1
    %v632 = vadd.f32 %v630, %v631
    %v633 = vrot.slane %v50, 4
    %v634 = vadd.f32 %v50, %v633
    %v635 = vrot.slane %v634, 2
    %v636 = vadd.f32 %v634, %v635
    %v637 = vrot.slane %v636, 1
    %v638 = vadd.f32 %v636, %v637
    %v639 = vrot.slane %v51, 4
    %v640 = vadd.f32 %v51, %v639
    %v641 = vrot.slane %v640, 2
    %v642 = vadd.f32 %v640, %v641
    %v643 = vrot.slane %v642, 1
    %v644 = vadd.f32 %v642, %v643
    %v645 = vrot.slane %v52, 4
    %v646 = vadd.f32 %v52, %v645
    %v647 = vrot.slane %v646, 2
    %v648 = vadd.f32 %v646, %v647
    %v649 = vrot.slane %v648, 1
    %v650 = vadd.f32 %v648, %v649
    %v651 = vrcp.pop 8.0
    %v652 = vmul.f32 %v620, %v651
    %v653 = vmul.f32 %v626, %v651
    %v654 = vmul.f32 %v632, %v651
    %v655 = vmul.f32 %v638, %v651
    %v656 = vmul.f32 %v644, %v651
    %v657 = vmul.f32 %v650, %v651
    %v658 = vmul.f32 %v47, %v47
    %v659 = vmul.f32 %v48, %v48
    %v660 = vmul.f32 %v49, %v49
    %v661 = vmul.f32 %v50, %v50
    %v662 = vmul.f32 %v51, %v51
    %v663 = vmul.f32 %v52, %v52
    %v664 = vrot.slane %v658, 4
    %v665 = vadd.f32 %v658, %v664
    %v666 = vrot.slane %v665, 2
    %v667 = vadd.f32 %v665, %v666
    %v668 = vrot.slane %v667, 1
    %v669 = vadd.f32 %v667, %v668
    %v670 = vrot.slane %v659, 4
    %v671 = vadd.f32 %v659, %v670
    %v672 = vrot.slane %v671, 2
    %v673 = vadd.f32 %v671, %v672
    %v674 = vrot.slane %v673, 1
    %v675 = vadd.f32 %v673, %v674
    %v676 = vrot.slane %v660, 4
    %v677 = vadd.f32 %v660, %v676
    %v678 = vrot.slane %v677, 2
    %v679 = vadd.f32 %v677, %v678
    %v680 = vrot.slane %v679, 1
    %v681 = vadd.f32 %v679, %v680
    %v682 = vrot.slane %v661, 4
    %v683 = vadd.f32 %v661, %v682
    %v684 = vrot.slane %v683, 2
    %v685 = vadd.f32 %v683, %v684
    %v686 = vrot.slane %v685, 1
    %v687 = vadd.f32 %v685, %v686
    %v688 = vrot.slane %v662, 4
    %v689 = vadd.f32 %v662, %v688
    %v690 = vrot.slane %v689, 2
    %v691 = vadd.f32 %v689, %v690
    %v692 = vrot.slane %v691, 1
    %v693 = vadd.f32 %v691, %v692
    %v694 = vrot.slane %v663, 4
    %v695 = vadd.f32 %v663, %v694
    %v696 = vrot.slane %v695, 2
    %v697 = vadd.f32 %v695, %v696
    %v698 = vrot.slane %v697, 1
    %v699 = vadd.f32 %v697, %v698
    %v700 = vmul.f32 %v669, %v651
    %v701 = vmul.f32 %v675, %v651
    %v702 = vmul.f32 %v681, %v651
    %v703 = vmul.f32 %v687, %v651
    %v704 = vmul.f32 %v693, %v651
    %v705 = vmul.f32 %v699, %v651
    %v706 = vmul.f32 %v652, %v652
    %v707 = vmul.f32 %v653, %v653
    %v708 = vmul.f32 %v654, %v654
    %v709 = vmul.f32 %v655, %v655
    %v710 = vmul.f32 %v656, %v656
    %v711 = vmul.f32 %v657, %v657
    %v712 = vsub.f32 %v700, %v706
    %v713 = vsub.f32 %v701, %v707
    %v714 = vsub.f32 %v702, %v708
    %v715 = vsub.f32 %v703, %v709
    %v716 = vsub.f32 %v704, %v710
    %v717 = vsub.f32 %v705, %v711
    %v718 = vmax.f32 %v712, 0.0
    %v719 = vmax.f32 %v713, 0.0
    %v720 = vmax.f32 %v714, 0.0
    %v721 = vmax.f32 %v715, 0.0
    %v722 = vmax.f32 %v716, 0.0
    %v723 = vmax.f32 %v717, 0.0
    %v724 = vadd.f32 %v718, 1e-06
    %v725 = vadd.f32 %v719, 1e-06
    %v726 = vadd.f32 %v720, 1e-06
    %v727 = vadd.f32 %v721, 1e-06
    %v728 = vadd.f32 %v722, 1e-06
    %v729 = vadd.f32 %v723, 1e-06
    %v730 = vlog2.pop %v724
    %v731 = vmul.f32 %v730, 0.6931472
    %v732 = vlog2.pop %v725
    %v733 = vmul.f32 %v732, 0.6931472
    %v734 = vlog2.pop %v726
    %v735 = vmul.f32 %v734, 0.6931472
    %v736 = vlog2.pop %v727
    %v737 = vmul.f32 %v736, 0.6931472
    %v738 = vlog2.pop %v728
    %v739 = vmul.f32 %v738, 0.6931472
    %v740 = vlog2.pop %v729
    %v741 = vmul.f32 %v740, 0.6931472
    %vm742 = vcmask 1040384
    %v743 = vsel %vm742, %v731, 0.0
    %v744 = vsel %vm742, %v733, 0.0
    %v745 = vadd.f32 %v743, %v744
    %v746 = vsel %vm742, %v735, 0.0
    %v747 = vadd.f32 %v745, %v746
    %v748 = vsel %vm742, %v737, 0.0
    %v749 = vadd.f32 %v747, %v748
    %v750 = vsel %vm742, %v739, 0.0
    %v751 = vadd.f32 %v749, %v750
    %v752 = vsel %vm742, %v741, 0.0
    %v753 = vadd.f32 %v751, %v752
    %754 = vadd.xlane.f32.xlu0 %v753
    %v755 = vpop.xlane.xlu0 %754
    %v756 = vrot.slane %v755, 4
    %v757 = vadd.f32 %v755, %v756
    %v758 = vrot.slane %v757, 2
    %v759 = vadd.f32 %v757, %v758
    %v760 = vrot.slane %v759, 1
    %v761 = vadd.f32 %v759, %v760
    %s762 = vtos %v761
    %v763 = vrot.slane %v53, 4
    %v764 = vadd.f32 %v53, %v763
    %v765 = vrot.slane %v764, 2
    %v766 = vadd.f32 %v764, %v765
    %v767 = vrot.slane %v766, 1
    %v768 = vadd.f32 %v766, %v767
    %v769 = vrot.slane %v54, 4
    %v770 = vadd.f32 %v54, %v769
    %v771 = vrot.slane %v770, 2
    %v772 = vadd.f32 %v770, %v771
    %v773 = vrot.slane %v772, 1
    %v774 = vadd.f32 %v772, %v773
    %v775 = vrot.slane %v55, 4
    %v776 = vadd.f32 %v55, %v775
    %v777 = vrot.slane %v776, 2
    %v778 = vadd.f32 %v776, %v777
    %v779 = vrot.slane %v778, 1
    %v780 = vadd.f32 %v778, %v779
    %v781 = vrot.slane %v56, 4
    %v782 = vadd.f32 %v56, %v781
    %v783 = vrot.slane %v782, 2
    %v784 = vadd.f32 %v782, %v783
    %v785 = vrot.slane %v784, 1
    %v786 = vadd.f32 %v784, %v785
    %v787 = vrot.slane %v57, 4
    %v788 = vadd.f32 %v57, %v787
    %v789 = vrot.slane %v788, 2
    %v790 = vadd.f32 %v788, %v789
    %v791 = vrot.slane %v790, 1
    %v792 = vadd.f32 %v790, %v791
    %v793 = vrot.slane %v58, 4
    %v794 = vadd.f32 %v58, %v793
    %v795 = vrot.slane %v794, 2
    %v796 = vadd.f32 %v794, %v795
    %v797 = vrot.slane %v796, 1
    %v798 = vadd.f32 %v796, %v797
    %v799 = vmul.f32 %v768, %v651
    %v800 = vmul.f32 %v774, %v651
    %v801 = vmul.f32 %v780, %v651
    %v802 = vmul.f32 %v786, %v651
    %v803 = vmul.f32 %v792, %v651
    %v804 = vmul.f32 %v798, %v651
    %v805 = vmul.f32 %v53, %v53
    %v806 = vmul.f32 %v54, %v54
    %v807 = vmul.f32 %v55, %v55
    %v808 = vmul.f32 %v56, %v56
    %v809 = vmul.f32 %v57, %v57
    %v810 = vmul.f32 %v58, %v58
    %v811 = vrot.slane %v805, 4
    %v812 = vadd.f32 %v805, %v811
    %v813 = vrot.slane %v812, 2
    %v814 = vadd.f32 %v812, %v813
    %v815 = vrot.slane %v814, 1
    %v816 = vadd.f32 %v814, %v815
    %v817 = vrot.slane %v806, 4
    %v818 = vadd.f32 %v806, %v817
    %v819 = vrot.slane %v818, 2
    %v820 = vadd.f32 %v818, %v819
    %v821 = vrot.slane %v820, 1
    %v822 = vadd.f32 %v820, %v821
    %v823 = vrot.slane %v807, 4
    %v824 = vadd.f32 %v807, %v823
    %v825 = vrot.slane %v824, 2
    %v826 = vadd.f32 %v824, %v825
    %v827 = vrot.slane %v826, 1
    %v828 = vadd.f32 %v826, %v827
    %v829 = vrot.slane %v808, 4
    %v830 = vadd.f32 %v808, %v829
    %v831 = vrot.slane %v830, 2
    %v832 = vadd.f32 %v830, %v831
    %v833 = vrot.slane %v832, 1
    %v834 = vadd.f32 %v832, %v833
    %v835 = vrot.slane %v809, 4
    %v836 = vadd.f32 %v809, %v835
    %v837 = vrot.slane %v836, 2
    %v838 = vadd.f32 %v836, %v837
    %v839 = vrot.slane %v838, 1
    %v840 = vadd.f32 %v838, %v839
    %v841 = vrot.slane %v810, 4
    %v842 = vadd.f32 %v810, %v841
    %v843 = vrot.slane %v842, 2
    %v844 = vadd.f32 %v842, %v843
    %v845 = vrot.slane %v844, 1
    %v846 = vadd.f32 %v844, %v845
    %v847 = vmul.f32 %v816, %v651
    %v848 = vmul.f32 %v822, %v651
    %v849 = vmul.f32 %v828, %v651
    %v850 = vmul.f32 %v834, %v651
    %v851 = vmul.f32 %v840, %v651
    %v852 = vmul.f32 %v846, %v651
    %v853 = vmul.f32 %v799, %v799
    %v854 = vmul.f32 %v800, %v800
    %v855 = vmul.f32 %v801, %v801
    %v856 = vmul.f32 %v802, %v802
    %v857 = vmul.f32 %v803, %v803
    %v858 = vmul.f32 %v804, %v804
    %v859 = vsub.f32 %v847, %v853
    %v860 = vsub.f32 %v848, %v854
    %v861 = vsub.f32 %v849, %v855
    %v862 = vsub.f32 %v850, %v856
    %v863 = vsub.f32 %v851, %v857
    %v864 = vsub.f32 %v852, %v858
    %v865 = vmax.f32 %v859, 0.0
    %v866 = vmax.f32 %v860, 0.0
    %v867 = vmax.f32 %v861, 0.0
    %v868 = vmax.f32 %v862, 0.0
    %v869 = vmax.f32 %v863, 0.0
    %v870 = vmax.f32 %v864, 0.0
    %v871 = vadd.f32 %v865, 1e-06
    %v872 = vadd.f32 %v866, 1e-06
    %v873 = vadd.f32 %v867, 1e-06
    %v874 = vadd.f32 %v868, 1e-06
    %v875 = vadd.f32 %v869, 1e-06
    %v876 = vadd.f32 %v870, 1e-06
    %v877 = vlog2.pop %v871
    %v878 = vmul.f32 %v877, 0.6931472
    %v879 = vlog2.pop %v872
    %v880 = vmul.f32 %v879, 0.6931472
    %v881 = vlog2.pop %v873
    %v882 = vmul.f32 %v881, 0.6931472
    %v883 = vlog2.pop %v874
    %v884 = vmul.f32 %v883, 0.6931472
    %v885 = vlog2.pop %v875
    %v886 = vmul.f32 %v885, 0.6931472
    %v887 = vlog2.pop %v876
    %v888 = vmul.f32 %v887, 0.6931472
    %v889 = vsel %vm742, %v878, 0.0
    %v890 = vsel %vm742, %v880, 0.0
    %v891 = vadd.f32 %v889, %v890
    %v892 = vsel %vm742, %v882, 0.0
    %v893 = vadd.f32 %v891, %v892
    %v894 = vsel %vm742, %v884, 0.0
    %v895 = vadd.f32 %v893, %v894
    %v896 = vsel %vm742, %v886, 0.0
    %v897 = vadd.f32 %v895, %v896
    %v898 = vsel %vm742, %v888, 0.0
    %v899 = vadd.f32 %v897, %v898
    %900 = vadd.xlane.f32.xlu0 %v899
    %v901 = vpop.xlane.xlu0 %900
    %v902 = vrot.slane %v901, 4
    %v903 = vadd.f32 %v901, %v902
    %v904 = vrot.slane %v903, 2
    %v905 = vadd.f32 %v903, %v904
    %v906 = vrot.slane %v905, 1
    %v907 = vadd.f32 %v905, %v906
    %s908 = vtos %v907
    %v909 = vrot.slane %v59, 4
    %v910 = vadd.f32 %v59, %v909
    %v911 = vrot.slane %v910, 2
    %v912 = vadd.f32 %v910, %v911
    %v913 = vrot.slane %v912, 1
    %v914 = vadd.f32 %v912, %v913
    %v915 = vrot.slane %v60, 4
    %v916 = vadd.f32 %v60, %v915
    %v917 = vrot.slane %v916, 2
    %v918 = vadd.f32 %v916, %v917
    %v919 = vrot.slane %v918, 1
    %v920 = vadd.f32 %v918, %v919
    %v921 = vrot.slane %v61, 4
    %v922 = vadd.f32 %v61, %v921
    %v923 = vrot.slane %v922, 2
    %v924 = vadd.f32 %v922, %v923
    %v925 = vrot.slane %v924, 1
    %v926 = vadd.f32 %v924, %v925
    %v927 = vrot.slane %v62, 4
    %v928 = vadd.f32 %v62, %v927
    %v929 = vrot.slane %v928, 2
    %v930 = vadd.f32 %v928, %v929
    %v931 = vrot.slane %v930, 1
    %v932 = vadd.f32 %v930, %v931
    %v933 = vrot.slane %v63, 4
    %v934 = vadd.f32 %v63, %v933
    %v935 = vrot.slane %v934, 2
    %v936 = vadd.f32 %v934, %v935
    %v937 = vrot.slane %v936, 1
    %v938 = vadd.f32 %v936, %v937
    %v939 = vrot.slane %v64, 4
    %v940 = vadd.f32 %v64, %v939
    %v941 = vrot.slane %v940, 2
    %v942 = vadd.f32 %v940, %v941
    %v943 = vrot.slane %v942, 1
    %v944 = vadd.f32 %v942, %v943
    %v945 = vmul.f32 %v914, %v651
    %v946 = vmul.f32 %v920, %v651
    %v947 = vmul.f32 %v926, %v651
    %v948 = vmul.f32 %v932, %v651
    %v949 = vmul.f32 %v938, %v651
    %v950 = vmul.f32 %v944, %v651
    %v951 = vmul.f32 %v59, %v59
    %v952 = vmul.f32 %v60, %v60
    %v953 = vmul.f32 %v61, %v61
    %v954 = vmul.f32 %v62, %v62
    %v955 = vmul.f32 %v63, %v63
    %v956 = vmul.f32 %v64, %v64
    %v957 = vrot.slane %v951, 4
    %v958 = vadd.f32 %v951, %v957
    %v959 = vrot.slane %v958, 2
    %v960 = vadd.f32 %v958, %v959
    %v961 = vrot.slane %v960, 1
    %v962 = vadd.f32 %v960, %v961
    %v963 = vrot.slane %v952, 4
    %v964 = vadd.f32 %v952, %v963
    %v965 = vrot.slane %v964, 2
    %v966 = vadd.f32 %v964, %v965
    %v967 = vrot.slane %v966, 1
    %v968 = vadd.f32 %v966, %v967
    %v969 = vrot.slane %v953, 4
    %v970 = vadd.f32 %v953, %v969
    %v971 = vrot.slane %v970, 2
    %v972 = vadd.f32 %v970, %v971
    %v973 = vrot.slane %v972, 1
    %v974 = vadd.f32 %v972, %v973
    %v975 = vrot.slane %v954, 4
    %v976 = vadd.f32 %v954, %v975
    %v977 = vrot.slane %v976, 2
    %v978 = vadd.f32 %v976, %v977
    %v979 = vrot.slane %v978, 1
    %v980 = vadd.f32 %v978, %v979
    %v981 = vrot.slane %v955, 4
    %v982 = vadd.f32 %v955, %v981
    %v983 = vrot.slane %v982, 2
    %v984 = vadd.f32 %v982, %v983
    %v985 = vrot.slane %v984, 1
    %v986 = vadd.f32 %v984, %v985
    %v987 = vrot.slane %v956, 4
    %v988 = vadd.f32 %v956, %v987
    %v989 = vrot.slane %v988, 2
    %v990 = vadd.f32 %v988, %v989
    %v991 = vrot.slane %v990, 1
    %v992 = vadd.f32 %v990, %v991
    %v993 = vmul.f32 %v962, %v651
    %v994 = vmul.f32 %v968, %v651
    %v995 = vmul.f32 %v974, %v651
    %v996 = vmul.f32 %v980, %v651
    %v997 = vmul.f32 %v986, %v651
    %v998 = vmul.f32 %v992, %v651
    %v999 = vmul.f32 %v945, %v945
    %v1000 = vmul.f32 %v946, %v946
    %v1001 = vmul.f32 %v947, %v947
    %v1002 = vmul.f32 %v948, %v948
    %v1003 = vmul.f32 %v949, %v949
    %v1004 = vmul.f32 %v950, %v950
    %v1005 = vsub.f32 %v993, %v999
    %v1006 = vsub.f32 %v994, %v1000
    %v1007 = vsub.f32 %v995, %v1001
    %v1008 = vsub.f32 %v996, %v1002
    %v1009 = vsub.f32 %v997, %v1003
    %v1010 = vsub.f32 %v998, %v1004
    %v1011 = vmax.f32 %v1005, 0.0
    %v1012 = vmax.f32 %v1006, 0.0
    %v1013 = vmax.f32 %v1007, 0.0
    %v1014 = vmax.f32 %v1008, 0.0
    %v1015 = vmax.f32 %v1009, 0.0
    %v1016 = vmax.f32 %v1010, 0.0
    %v1017 = vadd.f32 %v1011, 1e-06
    %v1018 = vadd.f32 %v1012, 1e-06
    %v1019 = vadd.f32 %v1013, 1e-06
    %v1020 = vadd.f32 %v1014, 1e-06
    %v1021 = vadd.f32 %v1015, 1e-06
    %v1022 = vadd.f32 %v1016, 1e-06
    %v1023 = vlog2.pop %v1017
    %v1024 = vmul.f32 %v1023, 0.6931472
    %v1025 = vlog2.pop %v1018
    %v1026 = vmul.f32 %v1025, 0.6931472
    %v1027 = vlog2.pop %v1019
    %v1028 = vmul.f32 %v1027, 0.6931472
    %v1029 = vlog2.pop %v1020
    %v1030 = vmul.f32 %v1029, 0.6931472
    %v1031 = vlog2.pop %v1021
    %v1032 = vmul.f32 %v1031, 0.6931472
    %v1033 = vlog2.pop %v1022
    %v1034 = vmul.f32 %v1033, 0.6931472
    %v1035 = vsel %vm742, %v1024, 0.0
    %v1036 = vsel %vm742, %v1026, 0.0
    %v1037 = vadd.f32 %v1035, %v1036
    %v1038 = vsel %vm742, %v1028, 0.0
    %v1039 = vadd.f32 %v1037, %v1038
    %v1040 = vsel %vm742, %v1030, 0.0
    %v1041 = vadd.f32 %v1039, %v1040
    %v1042 = vsel %vm742, %v1032, 0.0
    %v1043 = vadd.f32 %v1041, %v1042
    %v1044 = vsel %vm742, %v1034, 0.0
    %v1045 = vadd.f32 %v1043, %v1044
    %1046 = vadd.xlane.f32.xlu0 %v1045
    %v1047 = vpop.xlane.xlu0 %1046
    %v1048 = vrot.slane %v1047, 4
    %v1049 = vadd.f32 %v1047, %v1048
    %v1050 = vrot.slane %v1049, 2
    %v1051 = vadd.f32 %v1049, %v1050
    %v1052 = vrot.slane %v1051, 1
    %v1053 = vadd.f32 %v1051, %v1052
    %s1054 = vtos %v1053
    %v1055 = vrcp.pop %v871
    %v1056 = vrcp.pop %v872
    %v1057 = vrcp.pop %v873
    %v1058 = vrcp.pop %v874
    %v1059 = vrcp.pop %v875
    %v1060 = vrcp.pop %v876
    %v1061 = vrcp.pop %v724
    %v1062 = vrcp.pop %v725
    %v1063 = vrcp.pop %v726
    %v1064 = vrcp.pop %v727
    %v1065 = vrcp.pop %v728
    %v1066 = vrcp.pop %v729
    %v1067 = vsub.f32 %v945, %v799
    %v1068 = vsub.f32 %v946, %v800
    %v1069 = vsub.f32 %v947, %v801
    %v1070 = vsub.f32 %v948, %v802
    %v1071 = vsub.f32 %v949, %v803
    %v1072 = vsub.f32 %v950, %v804
    %v1073 = vmul.f32 %v1067, %v1067
    %v1074 = vmul.f32 %v1068, %v1068
    %v1075 = vmul.f32 %v1069, %v1069
    %v1076 = vmul.f32 %v1070, %v1070
    %v1077 = vmul.f32 %v1071, %v1071
    %v1078 = vmul.f32 %v1072, %v1072
    %v1079 = vadd.f32 %v1017, %v1073
    %v1080 = vadd.f32 %v1018, %v1074
    %v1081 = vadd.f32 %v1019, %v1075
    %v1082 = vadd.f32 %v1020, %v1076
    %v1083 = vadd.f32 %v1021, %v1077
    %v1084 = vadd.f32 %v1022, %v1078
    %v1085 = vmul.f32 %v1079, %v1055
    %v1086 = vmul.f32 %v1080, %v1056
    %v1087 = vmul.f32 %v1081, %v1057
    %v1088 = vmul.f32 %v1082, %v1058
    %v1089 = vmul.f32 %v1083, %v1059
    %v1090 = vmul.f32 %v1084, %v1060
    %v1091 = vsel %vm742, %v1085, 0.0
    %v1092 = vsel %vm742, %v1086, 0.0
    %v1093 = vadd.f32 %v1091, %v1092
    %v1094 = vsel %vm742, %v1087, 0.0
    %v1095 = vadd.f32 %v1093, %v1094
    %v1096 = vsel %vm742, %v1088, 0.0
    %v1097 = vadd.f32 %v1095, %v1096
    %v1098 = vsel %vm742, %v1089, 0.0
    %v1099 = vadd.f32 %v1097, %v1098
    %v1100 = vsel %vm742, %v1090, 0.0
    %v1101 = vadd.f32 %v1099, %v1100
    %1102 = vadd.xlane.f32.xlu0 %v1101
    %v1103 = vpop.xlane.xlu0 %1102
    %v1104 = vrot.slane %v1103, 4
    %v1105 = vadd.f32 %v1103, %v1104
    %v1106 = vrot.slane %v1105, 2
    %v1107 = vadd.f32 %v1105, %v1106
    %v1108 = vrot.slane %v1107, 1
    %v1109 = vadd.f32 %v1107, %v1108
    %s1110 = vtos %v1109
    %s1111 = ssub.f32 %s908, %s1054
    %s1112 = sadd.f32 %s1110, %s1111
    %s1113 = ssub.f32 %s1112, 768.0
    %s1114 = smul.f32 %s1113, 0.5
    %s1115 = scalar_lea.smem [#allocation9], 0
    %1116 = sst [smem:[%s1115]] %s1114
    %v1117 = vsub.f32 %v799, %v652
    %v1118 = vsub.f32 %v800, %v653
    %v1119 = vsub.f32 %v801, %v654
    %v1120 = vsub.f32 %v802, %v655
    %v1121 = vsub.f32 %v803, %v656
    %v1122 = vsub.f32 %v804, %v657
    %v1123 = vmul.f32 %v1117, %v1117
    %v1124 = vmul.f32 %v1118, %v1118
    %v1125 = vmul.f32 %v1119, %v1119
    %v1126 = vmul.f32 %v1120, %v1120
    %v1127 = vmul.f32 %v1121, %v1121
    %v1128 = vmul.f32 %v1122, %v1122
    %v1129 = vadd.f32 %v871, %v1123
    %v1130 = vadd.f32 %v872, %v1124
    %v1131 = vadd.f32 %v873, %v1125
    %v1132 = vadd.f32 %v874, %v1126
    %v1133 = vadd.f32 %v875, %v1127
    %v1134 = vadd.f32 %v876, %v1128
    %v1135 = vmul.f32 %v1129, %v1061
    %v1136 = vmul.f32 %v1130, %v1062
    %v1137 = vmul.f32 %v1131, %v1063
    %v1138 = vmul.f32 %v1132, %v1064
    %v1139 = vmul.f32 %v1133, %v1065
    %v1140 = vmul.f32 %v1134, %v1066
    %v1141 = vsel %vm742, %v1135, 0.0
    %v1142 = vsel %vm742, %v1136, 0.0
    %v1143 = vadd.f32 %v1141, %v1142
    %v1144 = vsel %vm742, %v1137, 0.0
    %v1145 = vadd.f32 %v1143, %v1144
    %v1146 = vsel %vm742, %v1138, 0.0
    %v1147 = vadd.f32 %v1145, %v1146
    %v1148 = vsel %vm742, %v1139, 0.0
    %v1149 = vadd.f32 %v1147, %v1148
    %v1150 = vsel %vm742, %v1140, 0.0
    %v1151 = vadd.f32 %v1149, %v1150
    %1152 = vadd.xlane.f32.xlu0 %v1151
    %v1153 = vpop.xlane.xlu0 %1152
    %v1154 = vrot.slane %v1153, 4
    %v1155 = vadd.f32 %v1153, %v1154
    %v1156 = vrot.slane %v1155, 2
    %v1157 = vadd.f32 %v1155, %v1156
    %v1158 = vrot.slane %v1157, 1
    %v1159 = vadd.f32 %v1157, %v1158
    %s1160 = vtos %v1159
    %s1161 = ssub.f32 %s762, %s908
    %s1162 = sadd.f32 %s1160, %s1161
    %s1163 = ssub.f32 %s1162, 768.0
    %s1164 = smul.f32 %s1163, 0.5
    %s1165 = scalar_lea.smem [#allocation9], 1
    %1166 = sst [smem:[%s1165]] %s1164
    // Predicated region
    $region22: #{fwd.1} parent=1 // pred_check
      _
    $region23: #{fwd.1} parent=1 // pred_check_branch
      %1168 = sbr.rel (0) target = $region25
    $region24: #{fwd.1} parent=1 // pred_region
      %s1170 = ssub.s32 384, 384
      %1171 = vsyncadd [#allocation4], %s1170
      %s1172 = sshll.u32 [#allocation8], 4
      %s1173 = int_to_ptr.vmem [resolvable:$true] %s1172
      %1178 = dma.vmem_to_hbm [thread:$0]  %s1173, 384, %s3, [#allocation4], 128, 128, 8
    $region25: #{fwd.1} parent=1 // pred_fallthru
      _
    // Predicated region
    $region26: #{fwd.1} parent=1 // pred_check
      _
    $region27: #{fwd.1} parent=1 // pred_check_branch
      %1180 = sbr.rel (0) target = $region29
    $region28: #{fwd.1} parent=1 // pred_region
      %s1182 = ssub.s32 16, 16
      %1183 = vsyncadd [#allocation5], %s1182
      %1186 = dma.smem_to_hbm [#allocation9], 16, %s4, [#allocation5]
    $region29: #{fwd.1} parent=1 // pred_fallthru
      _
    // Predicated region
    $region30: #{fwd.1} parent=1 // pred_check
      _
    $region31: #{fwd.1} parent=1 // pred_check_branch
      %1188 = sbr.rel (0) target = $region33
    $region32: #{fwd.1} parent=1 // pred_region
      %1189 = dma.done [#allocation4], 384
    $region33: #{fwd.1} parent=1 // pred_fallthru
      _
    // Predicated region
    $region34: #{fwd.1} parent=1 // pred_check
      _
    $region35: #{fwd.1} parent=1 // pred_check_branch
      %1191 = sbr.rel (0) target = $region37
    $region36: #{fwd.1} parent=1 // pred_region
      %1192 = dma.done [#allocation5], 16
    $region37: #{fwd.1} parent=1 // pred_fallthru
      _
    %1193 = sfence
    %1194 = vsyncpa [#allocation3], 1
    %1195 = vsyncpa [#allocation7], 1
    %1196 = vsyncpa [#allocation4], 1
    %1197 = vsyncpa [#allocation5], 1

</llo_original>
